<compile_context>
chip_gen: v6e
topology: v6e:2x2x1
jax: 0.10.0
libtpu: 0.0.40
codegen_flags: <defaults>
</compile_context>

<pallas_src>
import functools

import jax
import jax.numpy as jnp
from jax.experimental import pallas as pl
from jax.experimental.pallas import tpu as pltpu

OBS_DIM = 32
HIDDEN = 32
NUM_ACTIONS = 16
OUT_PAD = 128                 # lane-dense padded width of the fused actor+critic output
VALUE_LANE = NUM_ACTIONS      # critic output lives in this lane of the fused slab
ENV_VERSION = 1
NEG_FLT_MAX = -((2.0 - 2.0 ** (-23)) * 2.0 ** 127)   # matches the torch -FLT_MAX constant


# ----------------------------------------------------------------------------
# Fused kernel:
#   latent = tanh(obs @ W1 + b1)
#   slab   = latent @ Wout + bout          (lanes [0,16)=logits, lane 16=value, rest pad)
#   probs  = softmax(where(mask, logits, -FLT_MAX))   over the padded 128 lanes
#   action = argmax(masked logits)         (== argmax(probs), first max wins)
# ----------------------------------------------------------------------------
def _fused_kernel(obs_ref, mask_ref, w1_ref, b1_ref, wout_ref, bout_ref,
                  out_ref, probs_ref, action_ref):
    latent = jnp.tanh(
        jnp.dot(obs_ref[...], w1_ref[...], preferred_element_type=jnp.float32)
        + b1_ref[...]
    )
    out = (
        jnp.dot(latent, wout_ref[...], preferred_element_type=jnp.float32)
        + bout_ref[...]
    )
    out_ref[...] = out                                   # lane-dense (tb, 128) store

    # categorical_masked (pad lanes and the value lane carry mask==0 -> dropped)
    legal = mask_ref[...] != 0
    logits1 = jnp.where(legal, out, jnp.float32(NEG_FLT_MAX))
    m = jnp.max(logits1, axis=-1, keepdims=True)
    e = jnp.exp(logits1 - m)                             # == softmax(logits1 - lse)
    probs_ref[...] = e / jnp.sum(e, axis=-1, keepdims=True)

    # deterministic predict: argmax over masked logits (first maximal lane)
    lanes = jax.lax.broadcasted_iota(jnp.int32, logits1.shape, 1)
    idx = jnp.where(logits1 == m, lanes, jnp.int32(OUT_PAD))
    action_ref[...] = jnp.min(idx, axis=-1, keepdims=True)


@functools.partial(jax.jit, static_argnames=("block_b",))
def jit_model_fused(obs, mask, params, *, block_b=128):
    """Fused JitModel pass for a batch of observations.

    obs:  (B, OBS_DIM)      float32
    mask: (B, NUM_ACTIONS)  bool / int
    Returns: logits (B, NUM_ACTIONS), value (B, 1), probs (B, NUM_ACTIONS), action (B,) int32
    """
    w1, b1, wout, bout = params
    B = obs.shape[0]
    tb = min(block_b, B)
    assert B % tb == 0, "batch must be a multiple of the batch tile"

    # Pad the mask to the lane-dense width; pad lanes (incl. the value lane) are illegal.
    mask_p = jnp.zeros((B, OUT_PAD), jnp.int32).at[:, :NUM_ACTIONS].set(
        mask.astype(jnp.int32))

    out_slab, probs_p, action = pl.pallas_call(
        _fused_kernel,
        out_shape=(
            jax.ShapeDtypeStruct((B, OUT_PAD), jnp.float32),
            jax.ShapeDtypeStruct((B, OUT_PAD), jnp.float32),
            jax.ShapeDtypeStruct((B, 1), jnp.int32),
        ),
        grid_spec=pltpu.PrefetchScalarGridSpec(
            num_scalar_prefetch=0,
            grid=(B // tb,),
            in_specs=[
                pl.BlockSpec((tb, OBS_DIM), lambda i: (i, 0)),
                pl.BlockSpec((tb, OUT_PAD), lambda i: (i, 0)),
                pl.BlockSpec((OBS_DIM, HIDDEN), lambda i: (0, 0)),
                pl.BlockSpec((1, HIDDEN), lambda i: (0, 0)),
                pl.BlockSpec((HIDDEN, OUT_PAD), lambda i: (0, 0)),
                pl.BlockSpec((1, OUT_PAD), lambda i: (0, 0)),
            ],
            out_specs=(
                pl.BlockSpec((tb, OUT_PAD), lambda i: (i, 0)),
                pl.BlockSpec((tb, OUT_PAD), lambda i: (i, 0)),
                pl.BlockSpec((tb, 1), lambda i: (i, 0)),
            ),
        ),
        compiler_params=pltpu.CompilerParams(
            dimension_semantics=("parallel",)),   # batch tiles shard across v7x's 2 TCs
    )(obs, mask_p, w1, b1, wout, bout)

    logits = out_slab[:, :NUM_ACTIONS]
    value = out_slab[:, VALUE_LANE:VALUE_LANE + 1]
    probs = probs_p[:, :NUM_ACTIONS]
    return logits, value, probs, action[:, 0]


# ----------------------------------------------------------------------------
# TorchScript-style single-observation entry points (thin wrappers over the fused call)
# ----------------------------------------------------------------------------
def forward(obs, params):
    """JitModel.forward: action logits for a single observation."""
    logits, _, _, _ = jit_model_fused(
        obs[None, :], jnp.ones((1, NUM_ACTIONS), jnp.bool_), params)
    return logits


def get_value(obs, params) -> float:
    """JitModel.get_value (encoder_critic is None -> shares encoder_actor)."""
    _, value, _, _ = jit_model_fused(
        obs[None, :], jnp.ones((1, NUM_ACTIONS), jnp.bool_), params)
    return float(value[0, 0])


def predict(obs, mask, params, deterministic: bool = True) -> int:
    """JitModel.predict (deterministic path)."""
    _, _, probs, action = jit_model_fused(obs[None, :], mask[None, :], params)
    if deterministic:
        return int(action[0])
    # TODO(synk): stochastic torch.multinomial sampling path is not implemented
    # in-kernel; sample from `probs` with jax.random.categorical on the host if needed.
    raise NotImplementedError("stochastic sampling path not implemented")


def get_version() -> int:
    return ENV_VERSION


# ----------------------------------------------------------------------------
# Deterministic parameter init. Actor + critic are fused into one lane-dense
# (HIDDEN, 128) output matmul ONCE here, not per call.
# ----------------------------------------------------------------------------
def init_params(key):
    k1, k2, k3 = jax.random.split(key, 3)
    w1 = jax.random.normal(k1, (OBS_DIM, HIDDEN), jnp.float32) * 0.1
    b1 = jnp.zeros((1, HIDDEN), jnp.float32)
    w2 = jax.random.normal(k2, (HIDDEN, NUM_ACTIONS), jnp.float32) * 0.1
    b2 = jnp.zeros((NUM_ACTIONS,), jnp.float32)
    wc = jax.random.normal(k3, (HIDDEN, 1), jnp.float32) * 0.1
    bc = jnp.zeros((1,), jnp.float32)

    wout = jnp.zeros((HIDDEN, OUT_PAD), jnp.float32)
    wout = wout.at[:, :NUM_ACTIONS].set(w2).at[:, VALUE_LANE].set(wc[:, 0])
    bout = jnp.zeros((1, OUT_PAD), jnp.float32)
    bout = bout.at[0, :NUM_ACTIONS].set(b2).at[0, VALUE_LANE].set(bc[0])
    return (w1, b1, wout, bout)


# Pure-JAX reference (high precision) for correctness checks.
def _reference(obs, mask, params):
    w1, b1, wout, bout = params
    hp = jax.lax.Precision.HIGHEST
    latent = jnp.tanh(jnp.dot(obs, w1, precision=hp) + b1)
    out = jnp.dot(latent, wout, precision=hp) + bout
    logits = out[:, :NUM_ACTIONS]
    value = out[:, VALUE_LANE:VALUE_LANE + 1]
    logits1 = jnp.where(mask != 0, logits, jnp.float32(NEG_FLT_MAX))
    logits2 = logits1 - jax.scipy.special.logsumexp(logits1, axis=-1, keepdims=True)
    probs = jax.nn.softmax(logits2, axis=-1)
    return logits, value, probs


if __name__ == "__main__":
    key = jax.random.PRNGKey(0)
    pkey, okey, mkey = jax.random.split(key, 3)
    params = init_params(pkey)

    # Batched rollout path: B a multiple of the MXU row width; shards across v7x cores.
    B = 256
    obs = jax.random.normal(okey, (B, OBS_DIM), jnp.float32)
    mask = jax.random.uniform(mkey, (B, NUM_ACTIONS)) > 0.5
    mask = mask.at[:, 0].set(True)   # guarantee >=1 legal action per row

    logits, value, probs, action = jit_model_fused(obs, mask, params)
    jax.block_until_ready((logits, value, probs, action))

    assert logits.shape == (B, NUM_ACTIONS)
    assert value.shape == (B, 1)
    assert probs.shape == (B, NUM_ACTIONS)
    assert action.shape == (B,)

    r_logits, r_value, r_probs = _reference(obs, mask, params)
    assert jnp.allclose(logits, r_logits, atol=1e-4, rtol=1e-4)
    assert jnp.allclose(value, r_value, atol=1e-4, rtol=1e-4)
    assert jnp.allclose(probs, r_probs, atol=1e-4, rtol=1e-4)

    # argmax consistency (exact, on the kernel's own logits)
    masked = jnp.where(mask, logits, jnp.float32(NEG_FLT_MAX))
    assert jnp.array_equal(action, jnp.argmax(masked, axis=-1).astype(jnp.int32))
    # masked-out actions have ~zero probability; rows sum to 1
    assert float(jnp.max(jnp.where(mask, 0.0, probs))) < 1e-6
    assert float(jnp.max(jnp.abs(jnp.sum(probs, axis=-1) - 1.0))) < 1e-4

    # Single-observation (latency-path) entry points, matching the TorchScript API.
    a0 = predict(obs[0], mask[0], params, deterministic=True)
    v0 = get_value(obs[0], params)
    l0 = forward(obs[0], params)
    jax.block_until_ready(l0)
    assert l0.shape == (1, NUM_ACTIONS)
    assert a0 == int(jnp.argmax(jnp.where(mask[0], r_logits[0], jnp.float32(NEG_FLT_MAX))))
    assert abs(v0 - float(r_value[0, 0])) < 1e-4
    assert get_version() == ENV_VERSION

    print("KERNEL_OK")
</pallas_src>

<mosaic_0001>
module attributes {stable_mosaic.version = 11 : i64} {
  func.func @_fused_kernel(%arg0: i32, %arg1: memref<128x32xf32, #tpu.memory_space<vmem>>, %arg2: memref<128x128xi32, #tpu.memory_space<vmem>>, %arg3: memref<32x32xf32, #tpu.memory_space<vmem>>, %arg4: memref<1x32xf32, #tpu.memory_space<vmem>>, %arg5: memref<32x128xf32, #tpu.memory_space<vmem>>, %arg6: memref<1x128xf32, #tpu.memory_space<vmem>>, %arg7: memref<128x128xf32, #tpu.memory_space<vmem>>, %arg8: memref<128x128xf32, #tpu.memory_space<vmem>>, %arg9: memref<128x1xi32, #tpu.memory_space<vmem>>) attributes {dimension_semantics = [#tpu.dimension_semantics<parallel>], iteration_bounds = array<i64: 2>, scalar_prefetch = 0 : i64, scratch_operands = 0 : i64, tpu.core_type = #tpu.core_type<tc>, window_params = [{transform_indices = @transform_0, window_bounds = array<i64: 128, 32>}, {transform_indices = @transform_1, window_bounds = array<i64: 128, 128>}, {pipeline_mode = #tpu.pipeline_mode<synchronous>, transform_indices = @transform_2, window_bounds = array<i64: 32, 32>}, {pipeline_mode = #tpu.pipeline_mode<synchronous>, transform_indices = @transform_3, window_bounds = array<i64: 1, 32>}, {pipeline_mode = #tpu.pipeline_mode<synchronous>, transform_indices = @transform_4, window_bounds = array<i64: 32, 128>}, {pipeline_mode = #tpu.pipeline_mode<synchronous>, transform_indices = @transform_5, window_bounds = array<i64: 1, 128>}, {transform_indices = @transform_6, window_bounds = array<i64: 128, 128>}, {transform_indices = @transform_7, window_bounds = array<i64: 128, 128>}, {transform_indices = @transform_8, window_bounds = array<i64: 128, 1>}]} {
    %c0 = arith.constant 0 : index
    %c0_0 = arith.constant 0 : index
    %0 = vector.load %arg1[%c0, %c0_0] : memref<128x32xf32, #tpu.memory_space<vmem>>, vector<128x32xf32>
    %c0_1 = arith.constant 0 : index
    %c0_2 = arith.constant 0 : index
    %1 = vector.load %arg3[%c0_1, %c0_2] : memref<32x32xf32, #tpu.memory_space<vmem>>, vector<32x32xf32>
    %cst = arith.constant dense<0.000000e+00> : vector<128x32xf32>
    %2 = tpu.matmul %0, %1, %cst {dimension_numbers = #tpu.dot_dimension_numbers<[1], [0], [0], [1], [0, 0, 1, 1], [], []>} : vector<128x32xf32>, vector<32x32xf32>, vector<128x32xf32> -> vector<128x32xf32>
    %c0_3 = arith.constant 0 : index
    %c0_4 = arith.constant 0 : index
    %3 = vector.load %arg4[%c0_3, %c0_4] : memref<1x32xf32, #tpu.memory_space<vmem>>, vector<1x32xf32>
    %4 = vector.broadcast %3 : vector<1x32xf32> to vector<128x32xf32>
    %5 = arith.addf %2, %4 : vector<128x32xf32>
    %6 = math.tanh %5 : vector<128x32xf32>
    %c0_5 = arith.constant 0 : index
    %c0_6 = arith.constant 0 : index
    %7 = vector.load %arg5[%c0_5, %c0_6] : memref<32x128xf32, #tpu.memory_space<vmem>>, vector<32x128xf32>
    %cst_7 = arith.constant dense<0.000000e+00> : vector<128x128xf32>
    %8 = tpu.matmul %6, %7, %cst_7 {dimension_numbers = #tpu.dot_dimension_numbers<[1], [0], [0], [1], [0, 0, 1, 1], [], []>} : vector<128x32xf32>, vector<32x128xf32>, vector<128x128xf32> -> vector<128x128xf32>
    %c0_8 = arith.constant 0 : index
    %c0_9 = arith.constant 0 : index
    %9 = vector.load %arg6[%c0_8, %c0_9] : memref<1x128xf32, #tpu.memory_space<vmem>>, vector<1x128xf32>
    %10 = vector.broadcast %9 : vector<1x128xf32> to vector<128x128xf32>
    %11 = arith.addf %8, %10 : vector<128x128xf32>
    %c0_10 = arith.constant 0 : index
    %c0_11 = arith.constant 0 : index
    %12 = vector.load %arg7[%c0_10, %c0_11] : memref<128x128xf32, #tpu.memory_space<vmem>>, vector<128x128xf32>
    tpu.vector_store %arg7[%c0_10, %c0_11], %11 {strides = array<i32>} : memref<128x128xf32, #tpu.memory_space<vmem>>, vector<128x128xf32>,
    %c0_12 = arith.constant 0 : index
    %c0_13 = arith.constant 0 : index
    %13 = vector.load %arg2[%c0_12, %c0_13] : memref<128x128xi32, #tpu.memory_space<vmem>>, vector<128x128xi32>
    %c0_i32 = arith.constant 0 : i32
    %14 = vector.broadcast %c0_i32 : i32 to vector<128x128xi32>
    %15 = arith.cmpi ne, %13, %14 : vector<128x128xi32>
    %cst_14 = arith.constant -3.40282347E+38 : f32
    %16 = vector.broadcast %cst_14 : f32 to vector<128x128xf32>
    %17 = arith.select %15, %11, %16 : vector<128x128xi1>, vector<128x128xf32>
    %cst_15 = arith.constant dense<0xFF800000> : vector<128xf32>
    %18 = vector.multi_reduction <maximumf>, %17, %cst_15 [1] : vector<128x128xf32> to vector<128xf32>
    %19 = vector.shape_cast %18 : vector<128xf32> to vector<128x1xf32>
    %20 = vector.broadcast %19 : vector<128x1xf32> to vector<128x128xf32>
    %21 = arith.subf %17, %20 : vector<128x128xf32>
    %22 = math.exp %21 : vector<128x128xf32>
    %cst_16 = arith.constant dense<0.000000e+00> : vector<128xf32>
    %23 = vector.multi_reduction <add>, %22, %cst_16 [1] : vector<128x128xf32> to vector<128xf32>
    %24 = vector.shape_cast %23 : vector<128xf32> to vector<128x1xf32>
    %25 = vector.broadcast %24 : vector<128x1xf32> to vector<128x128xf32>
    %26 = arith.divf %22, %25 : vector<128x128xf32>
    %c0_17 = arith.constant 0 : index
    %c0_18 = arith.constant 0 : index
    %27 = vector.load %arg8[%c0_17, %c0_18] : memref<128x128xf32, #tpu.memory_space<vmem>>, vector<128x128xf32>
    tpu.vector_store %arg8[%c0_17, %c0_18], %26 {strides = array<i32>} : memref<128x128xf32, #tpu.memory_space<vmem>>, vector<128x128xf32>,
    %28 = tpu.iota {dimensions = array<i32: 1>} : vector<128x128xi32>
    %29 = vector.broadcast %19 : vector<128x1xf32> to vector<128x128xf32>
    %30 = arith.cmpf oeq, %17, %29 : vector<128x128xf32>
    %c128_i32 = arith.constant 128 : i32
    %31 = vector.broadcast %c128_i32 : i32 to vector<128x128xi32>
    %32 = arith.select %30, %28, %31 : vector<128x128xi1>, vector<128x128xi32>
    %cst_19 = arith.constant dense<2147483647> : vector<128xi32>
    %33 = vector.multi_reduction <minsi>, %32, %cst_19 [1] : vector<128x128xi32> to vector<128xi32>
    %34 = vector.shape_cast %33 : vector<128xi32> to vector<128x1xi32>
    %c0_20 = arith.constant 0 : index
    %c0_21 = arith.constant 0 : index
    %35 = vector.load %arg9[%c0_20, %c0_21] : memref<128x1xi32, #tpu.memory_space<vmem>>, vector<128x1xi32>
    tpu.vector_store %arg9[%c0_20, %c0_21], %34 {strides = array<i32>} : memref<128x1xi32, #tpu.memory_space<vmem>>, vector<128x1xi32>,
    return
  }
  func.func @transform_0(%arg0: i32) -> (i32, i32) {
    %c0_i32 = arith.constant 0 : i32
    %c0_i32_0 = arith.constant 0 : i32
    return %arg0, %c0_i32 : i32, i32
  }
  func.func @transform_1(%arg0: i32) -> (i32, i32) {
    %c0_i32 = arith.constant 0 : i32
    %c0_i32_0 = arith.constant 0 : i32
    return %arg0, %c0_i32 : i32, i32
  }
  func.func @transform_2(%arg0: i32) -> (i32, i32) {
    %c0_i32 = arith.constant 0 : i32
    %c0_i32_0 = arith.constant 0 : i32
    %c0_i32_1 = arith.constant 0 : i32
    return %c0_i32, %c0_i32_0 : i32, i32
  }
  func.func @transform_3(%arg0: i32) -> (i32, i32) {
    %c0_i32 = arith.constant 0 : i32
    %c0_i32_0 = arith.constant 0 : i32
    %c0_i32_1 = arith.constant 0 : i32
    return %c0_i32, %c0_i32_0 : i32, i32
  }
  func.func @transform_4(%arg0: i32) -> (i32, i32) {
    %c0_i32 = arith.constant 0 : i32
    %c0_i32_0 = arith.constant 0 : i32
    %c0_i32_1 = arith.constant 0 : i32
    return %c0_i32, %c0_i32_0 : i32, i32
  }
  func.func @transform_5(%arg0: i32) -> (i32, i32) {
    %c0_i32 = arith.constant 0 : i32
    %c0_i32_0 = arith.constant 0 : i32
    %c0_i32_1 = arith.constant 0 : i32
    return %c0_i32, %c0_i32_0 : i32, i32
  }
  func.func @transform_6(%arg0: i32) -> (i32, i32) {
    %c0_i32 = arith.constant 0 : i32
    %c0_i32_0 = arith.constant 0 : i32
    return %arg0, %c0_i32 : i32, i32
  }
  func.func @transform_7(%arg0: i32) -> (i32, i32) {
    %c0_i32 = arith.constant 0 : i32
    %c0_i32_0 = arith.constant 0 : i32
    return %arg0, %c0_i32 : i32, i32
  }
  func.func @transform_8(%arg0: i32) -> (i32, i32) {
    %c0_i32 = arith.constant 0 : i32
    %c0_i32_0 = arith.constant 0 : i32
    return %arg0, %c0_i32 : i32, i32
  }
}

</mosaic_0001>

<llo_original>
// kernel: jit_model_fused.1
$region0: #{jit_model_fused.1}
  #allocation0 [shape = 'u32[]', space=smem, size = 0x4, offset = 0x4, fixed_abs, tag = 'smem constant byte address 0x4 - core index']
  #allocation1 [shape = 'u32[144,128]{1,0:T(1,128)}', space=vmem, size = 0x12000, scoped, tag = 'internal scratch']
  %s0 = inlined_call_operand.vmem [shape: f32[256,32], index: 0, kind: input, shape index: {}]
  %s1 = inlined_call_operand.vmem [shape: s32[256,128], index: 1, kind: input, shape index: {}]
  %s2 = inlined_call_operand.vmem [shape: f32[32,32], index: 2, kind: input, shape index: {}]
  %s3 = inlined_call_operand.vmem [shape: f32[1,32], index: 3, kind: input, shape index: {}]
  %s4 = inlined_call_operand.vmem [shape: f32[32,128], index: 4, kind: input, shape index: {}]
  %s5 = inlined_call_operand.vmem [shape: f32[1,128], index: 5, kind: input, shape index: {}]
  %s6 = inlined_call_operand.vmem [shape: f32[256,128], index: 6, kind: output, shape index: {0}]
  %s7 = inlined_call_operand.vmem [shape: f32[256,128], index: 7, kind: output, shape index: {1}]
  %s8 = inlined_call_operand.vmem [shape: s32[256,1], index: 8, kind: output, shape index: {2}]
  %9 = xla_tuple %s6, %s7, %s8
  %s10 = sld [smem:[#allocation0]]
  $region73: #{jit_model_fused.1} parent=0
    _
  %s12 = ssub.s32 1, %s10
  %s13 = scalar_select 0, %s12, %s10
  loop: start=0, step=1, limit=4
  $region2: #{jit_model_fused.1} parent=0 // loop_pre_header
    _
  $region3: #{jit_model_fused.1} parent=0 // loop_header
    %s15 = sphi 0, %s19
    %p16 = scmp.ge.s32.totalorder %s15, 4
    %s25 = sphi 0, %s27
    %s28 = sphi 0, %s25
    %s29 = sphi 0, %s28
    %s45 = sphi 0, %s29
    %s51 = sphi 0, %s53
    %s54 = sphi 0, %s51
    %s55 = sphi 0, %s54
    %s71 = sphi 0, %s55
    %s75 = sphi 0, %s75
    %s77 = sphi 0, %s75
    %s78 = sphi 0, %s77
    %s92 = sphi 0, %s78
    %s96 = sphi 0, %s96
    %s98 = sphi 0, %s96
    %s99 = sphi 0, %s98
    %s113 = sphi 0, %s99
    %s117 = sphi 0, %s117
    %s119 = sphi 0, %s117
    %s120 = sphi 0, %s119
    %s134 = sphi 0, %s120
    %s138 = sphi 0, %s138
    %s140 = sphi 0, %s138
    %s141 = sphi 0, %s140
    %s155 = sphi 0, %s141
    %s161 = sphi 0, %s163
    %s164 = sphi 0, %s161
    %s165 = sphi 0, %s164
    %s181 = sphi 0, %s165
    %s187 = sphi 0, %s189
    %s190 = sphi 0, %s187
    %s191 = sphi 0, %s190
    %s207 = sphi 0, %s191
    %s213 = sphi 0, %s215
    %s216 = sphi 0, %s213
    %s217 = sphi 0, %s216
    %s233 = sphi 0, %s217
  $region4: #{jit_model_fused.1} parent=0 // loop_header_branch
    %18 = sbr.rel (%p16) target = $region8
  $region5: #{jit_model_fused.1} parent=0 // loop_body
    %s20 = ssub.s32 %s15, 1
    %s21 = ssub.s32 %s15, 2
    %s22 = sadd.s32 %s15, 1
    %s23 = ssub.s32 %s15, %s22
    %p24 = scmp.eq.s32.totalorder %s23, 0
    %s26 = sadd.s32 %s25, 1
    %s27 = scalar_select %p24, %s25, %s26
    %p30 = pneg %p24
    %p31 = scmp.eq.s32.totalorder %s15, 1
    %p32 = por %p30, %p31
    %p33 = scmp.ne.s32.totalorder %s25, %s28
    %p34 = scmp.eq.s32.totalorder %s15, 0
    %p35 = por %p33, %p34
    %p36 = scmp.ne.s32.totalorder %s25, %s28
    %p37 = scmp.eq.s32.totalorder %s20, 1
    %p38 = por %p36, %p37
    %p39 = scmp.ne.s32.totalorder %s28, %s29
    %p40 = scmp.eq.s32.totalorder %s20, 0
    %p41 = por %p39, %p40
    %p42 = scmp.ne.s32.totalorder %s28, %s29
    %p43 = scmp.eq.s32.totalorder %s21, 1
    %p44 = por %p42, %p43
    %p46 = scmp.ne.s32.totalorder %s29, %s45
    %p47 = scmp.eq.s32.totalorder %s21, 0
    %p48 = por %p46, %p47
    %s49 = ssub.s32 %s15, %s22
    %p50 = scmp.eq.s32.totalorder %s49, 0
    %s52 = sadd.s32 %s51, 1
    %s53 = scalar_select %p50, %s51, %s52
    %p56 = pneg %p50
    %p57 = scmp.eq.s32.totalorder %s15, 1
    %p58 = por %p56, %p57
    %p59 = scmp.ne.s32.totalorder %s51, %s54
    %p60 = scmp.eq.s32.totalorder %s15, 0
    %p61 = por %p59, %p60
    %p62 = scmp.ne.s32.totalorder %s51, %s54
    %p63 = scmp.eq.s32.totalorder %s20, 1
    %p64 = por %p62, %p63
    %p65 = scmp.ne.s32.totalorder %s54, %s55
    %p66 = scmp.eq.s32.totalorder %s20, 0
    %p67 = por %p65, %p66
    %p68 = scmp.ne.s32.totalorder %s54, %s55
    %p69 = scmp.eq.s32.totalorder %s21, 1
    %p70 = por %p68, %p69
    %p72 = scmp.ne.s32.totalorder %s55, %s71
    %p73 = scmp.eq.s32.totalorder %s21, 0
    %p74 = por %p72, %p73
    %s76 = sadd.s32 %s75, 1
    %p79 = scmp.eq.s32.totalorder %s15, 1
    %p80 = scmp.ne.s32.totalorder %s75, %s77
    %p81 = scmp.eq.s32.totalorder %s15, 0
    %p82 = por %p80, %p81
    %p83 = scmp.ne.s32.totalorder %s75, %s77
    %p84 = scmp.eq.s32.totalorder %s20, 1
    %p85 = por %p83, %p84
    %p86 = scmp.ne.s32.totalorder %s77, %s78
    %p87 = scmp.eq.s32.totalorder %s20, 0
    %p88 = por %p86, %p87
    %p89 = scmp.ne.s32.totalorder %s77, %s78
    %p90 = scmp.eq.s32.totalorder %s21, 1
    %p91 = por %p89, %p90
    %p93 = scmp.ne.s32.totalorder %s78, %s92
    %p94 = scmp.eq.s32.totalorder %s21, 0
    %p95 = por %p93, %p94
    %s97 = sadd.s32 %s96, 1
    %p100 = scmp.eq.s32.totalorder %s15, 1
    %p101 = scmp.ne.s32.totalorder %s96, %s98
    %p102 = scmp.eq.s32.totalorder %s15, 0
    %p103 = por %p101, %p102
    %p104 = scmp.ne.s32.totalorder %s96, %s98
    %p105 = scmp.eq.s32.totalorder %s20, 1
    %p106 = por %p104, %p105
    %p107 = scmp.ne.s32.totalorder %s98, %s99
    %p108 = scmp.eq.s32.totalorder %s20, 0
    %p109 = por %p107, %p108
    %p110 = scmp.ne.s32.totalorder %s98, %s99
    %p111 = scmp.eq.s32.totalorder %s21, 1
    %p112 = por %p110, %p111
    %p114 = scmp.ne.s32.totalorder %s99, %s113
    %p115 = scmp.eq.s32.totalorder %s21, 0
    %p116 = por %p114, %p115
    %s118 = sadd.s32 %s117, 1
    %p121 = scmp.eq.s32.totalorder %s15, 1
    %p122 = scmp.ne.s32.totalorder %s117, %s119
    %p123 = scmp.eq.s32.totalorder %s15, 0
    %p124 = por %p122, %p123
    %p125 = scmp.ne.s32.totalorder %s117, %s119
    %p126 = scmp.eq.s32.totalorder %s20, 1
    %p127 = por %p125, %p126
    %p128 = scmp.ne.s32.totalorder %s119, %s120
    %p129 = scmp.eq.s32.totalorder %s20, 0
    %p130 = por %p128, %p129
    %p131 = scmp.ne.s32.totalorder %s119, %s120
    %p132 = scmp.eq.s32.totalorder %s21, 1
    %p133 = por %p131, %p132
    %p135 = scmp.ne.s32.totalorder %s120, %s134
    %p136 = scmp.eq.s32.totalorder %s21, 0
    %p137 = por %p135, %p136
    %s139 = sadd.s32 %s138, 1
    %p142 = scmp.eq.s32.totalorder %s15, 1
    %p143 = scmp.ne.s32.totalorder %s138, %s140
    %p144 = scmp.eq.s32.totalorder %s15, 0
    %p145 = por %p143, %p144
    %p146 = scmp.ne.s32.totalorder %s138, %s140
    %p147 = scmp.eq.s32.totalorder %s20, 1
    %p148 = por %p146, %p147
    %p149 = scmp.ne.s32.totalorder %s140, %s141
    %p150 = scmp.eq.s32.totalorder %s20, 0
    %p151 = por %p149, %p150
    %p152 = scmp.ne.s32.totalorder %s140, %s141
    %p153 = scmp.eq.s32.totalorder %s21, 1
    %p154 = por %p152, %p153
    %p156 = scmp.ne.s32.totalorder %s141, %s155
    %p157 = scmp.eq.s32.totalorder %s21, 0
    %p158 = por %p156, %p157
    %s159 = ssub.s32 %s15, %s22
    %p160 = scmp.eq.s32.totalorder %s159, 0
    %s162 = sadd.s32 %s161, 1
    %s163 = scalar_select %p160, %s161, %s162
    %p166 = pneg %p160
    %p167 = scmp.eq.s32.totalorder %s15, 1
    %p168 = por %p166, %p167
    %p169 = scmp.ne.s32.totalorder %s161, %s164
    %p170 = scmp.eq.s32.totalorder %s15, 0
    %p171 = por %p169, %p170
    %p172 = scmp.ne.s32.totalorder %s161, %s164
    %p173 = scmp.eq.s32.totalorder %s20, 1
    %p174 = por %p172, %p173
    %p175 = scmp.ne.s32.totalorder %s164, %s165
    %p176 = scmp.eq.s32.totalorder %s20, 0
    %p177 = por %p175, %p176
    %p178 = scmp.ne.s32.totalorder %s164, %s165
    %p179 = scmp.eq.s32.totalorder %s21, 1
    %p180 = por %p178, %p179
    %p182 = scmp.ne.s32.totalorder %s165, %s181
    %p183 = scmp.eq.s32.totalorder %s21, 0
    %p184 = por %p182, %p183
    %s185 = ssub.s32 %s15, %s22
    %p186 = scmp.eq.s32.totalorder %s185, 0
    %s188 = sadd.s32 %s187, 1
    %s189 = scalar_select %p186, %s187, %s188
    %p192 = pneg %p186
    %p193 = scmp.eq.s32.totalorder %s15, 1
    %p194 = por %p192, %p193
    %p195 = scmp.ne.s32.totalorder %s187, %s190
    %p196 = scmp.eq.s32.totalorder %s15, 0
    %p197 = por %p195, %p196
    %p198 = scmp.ne.s32.totalorder %s187, %s190
    %p199 = scmp.eq.s32.totalorder %s20, 1
    %p200 = por %p198, %p199
    %p201 = scmp.ne.s32.totalorder %s190, %s191
    %p202 = scmp.eq.s32.totalorder %s20, 0
    %p203 = por %p201, %p202
    %p204 = scmp.ne.s32.totalorder %s190, %s191
    %p205 = scmp.eq.s32.totalorder %s21, 1
    %p206 = por %p204, %p205
    %p208 = scmp.ne.s32.totalorder %s191, %s207
    %p209 = scmp.eq.s32.totalorder %s21, 0
    %p210 = por %p208, %p209
    %s211 = ssub.s32 %s15, %s22
    %p212 = scmp.eq.s32.totalorder %s211, 0
    %s214 = sadd.s32 %s213, 1
    %s215 = scalar_select %p212, %s213, %s214
    %p218 = pneg %p212
    %p219 = scmp.eq.s32.totalorder %s15, 1
    %p220 = por %p218, %p219
    %p221 = scmp.ne.s32.totalorder %s213, %s216
    %p222 = scmp.eq.s32.totalorder %s15, 0
    %p223 = por %p221, %p222
    %p224 = scmp.ne.s32.totalorder %s213, %s216
    %p225 = scmp.eq.s32.totalorder %s20, 1
    %p226 = por %p224, %p225
    %p227 = scmp.ne.s32.totalorder %s216, %s217
    %p228 = scmp.eq.s32.totalorder %s20, 0
    %p229 = por %p227, %p228
    %p230 = scmp.ne.s32.totalorder %s216, %s217
    %p231 = scmp.eq.s32.totalorder %s21, 1
    %p232 = por %p230, %p231
    %p234 = scmp.ne.s32.totalorder %s217, %s233
    %p235 = scmp.eq.s32.totalorder %s21, 0
    %p236 = por %p234, %p235
    %p237 = scmp.le.s32.totalorder 1, %s15
    %p238 = scmp.lt.s32.totalorder %s15, 3
    %p239 = pnand %p237, %p238
    %p240 = pneg %p239
    // Predicated region
    $region9: #{jit_model_fused.1} parent=5 // pred_check
      _
    $region10: #{jit_model_fused.1} parent=5 // pred_check_branch
      %242 = sbr.rel (%p239) target = $region12
    $region11: #{jit_model_fused.1} parent=5 // pred_region
      %s243 = ssub.s32 %s15, 1
      // Predicated region
      $region13: #{jit_model_fused.1} parent=11 // pred_check
        %p244 = pneg %p88
      $region14: #{jit_model_fused.1} parent=11 // pred_check_branch
        %246 = sbr.rel (%p244) target = $region16
      $region15: #{jit_model_fused.1} parent=11 // pred_region
        _
      $region16: #{jit_model_fused.1} parent=11 // pred_fallthru
        _
      // Predicated region
      $region17: #{jit_model_fused.1} parent=11 // pred_check
        %p247 = pneg %p109
      $region18: #{jit_model_fused.1} parent=11 // pred_check_branch
        %249 = sbr.rel (%p247) target = $region20
      $region19: #{jit_model_fused.1} parent=11 // pred_region
        _
      $region20: #{jit_model_fused.1} parent=11 // pred_fallthru
        _
      // Predicated region
      $region21: #{jit_model_fused.1} parent=11 // pred_check
        %p250 = pneg %p130
      $region22: #{jit_model_fused.1} parent=11 // pred_check_branch
        %252 = sbr.rel (%p250) target = $region24
      $region23: #{jit_model_fused.1} parent=11 // pred_region
        _
      $region24: #{jit_model_fused.1} parent=11 // pred_fallthru
        _
      // Predicated region
      $region25: #{jit_model_fused.1} parent=11 // pred_check
        %p253 = pneg %p151
      $region26: #{jit_model_fused.1} parent=11 // pred_check_branch
        %255 = sbr.rel (%p253) target = $region28
      $region27: #{jit_model_fused.1} parent=11 // pred_region
        _
      $region28: #{jit_model_fused.1} parent=11 // pred_fallthru
        _
    $region12: #{jit_model_fused.1} parent=5 // pred_fallthru
      _
    %p256 = scmp.lt.s32.totalorder %s15, 2
    // Predicated region
    $region29: #{jit_model_fused.1} parent=5 // pred_check
      %p257 = pneg %p256
    $region30: #{jit_model_fused.1} parent=5 // pred_check_branch
      %259 = sbr.rel (%p257) target = $region32
    $region31: #{jit_model_fused.1} parent=5 // pred_region
      // Predicated region
      $region33: #{jit_model_fused.1} parent=31 // pred_check
        %p260 = pneg %p35
      $region34: #{jit_model_fused.1} parent=31 // pred_check_branch
        %262 = sbr.rel (%p260) target = $region36
      $region35: #{jit_model_fused.1} parent=31 // pred_region
        %s263 = smul.u32 16, %s15
        %p264 = scmp.lt.s32.totalorder %s263, 31
        %s265 = scalar_select %p264, %s263, 31
        %s266 = smul.addr %s265, 8
        %s267 = scalar_lea.vmem %s0, %s266
        %s268 = smul.u32 16, %s15
      $region36: #{jit_model_fused.1} parent=31 // pred_fallthru
        _
      // Predicated region
      $region37: #{jit_model_fused.1} parent=31 // pred_check
        %p269 = pneg %p61
      $region38: #{jit_model_fused.1} parent=31 // pred_check_branch
        %271 = sbr.rel (%p269) target = $region40
      $region39: #{jit_model_fused.1} parent=31 // pred_region
        %s272 = smul.u32 16, %s15
        %p273 = scmp.lt.s32.totalorder %s272, 31
        %s274 = scalar_select %p273, %s272, 31
        %s275 = smul.addr %s274, 8
        %s276 = scalar_lea.vmem %s1, %s275
        %s277 = smul.u32 16, %s15
      $region40: #{jit_model_fused.1} parent=31 // pred_fallthru
        _
    $region32: #{jit_model_fused.1} parent=5 // pred_fallthru
      _
    %p278 = scmp.le.s32.totalorder 1, %s15
    %p279 = scmp.lt.s32.totalorder %s15, 3
    %p280 = pnand %p278, %p279
    %p281 = pneg %p280
    // Predicated region
    $region41: #{jit_model_fused.1} parent=5 // pred_check
      _
    $region42: #{jit_model_fused.1} parent=5 // pred_check_branch
      %283 = sbr.rel (%p280) target = $region44
    $region43: #{jit_model_fused.1} parent=5 // pred_region
      %s284 = ssub.s32 %s15, 1
      %s285 = smul.u32 16, %s20
      %p286 = scmp.lt.s32.totalorder %s285, 31
      %s287 = scalar_select %p286, %s285, 31
      %s288 = smul.addr %s287, 8
      %s289 = scalar_lea.vmem %s0, %s288
      %p290 = pneg %p41
      %p291 = pneg %p38
      %s292 = smul.u32 16, %s20
      %p293 = scmp.lt.s32.totalorder %s292, 31
      %s294 = scalar_select %p293, %s292, 31
      %s295 = smul.addr %s294, 8
      %s296 = scalar_lea.vmem %s1, %s295
      %p297 = pneg %p67
      %p298 = pneg %p64
      %p299 = pneg %p88
      %p300 = pneg %p85
      %p301 = pneg %p109
      %p302 = pneg %p106
      %p303 = pneg %p130
      %p304 = pneg %p127
      %p305 = pneg %p151
      %p306 = pneg %p148
      %p307 = pneg %p177
      %p308 = pneg %p174
      %s309 = smul.u32 16, %s20
      %p310 = scmp.lt.s32.totalorder %s309, 31
      %s311 = scalar_select %p310, %s309, 31
      %s312 = smul.addr %s311, 8
      %s313 = scalar_lea.vmem %s6, %s312
      %p314 = pneg %p203
      %p315 = pneg %p200
      %s316 = smul.u32 16, %s20
      %p317 = scmp.lt.s32.totalorder %s316, 31
      %s318 = scalar_select %p317, %s316, 31
      %s319 = smul.addr %s318, 8
      %s320 = scalar_lea.vmem %s7, %s319
      %p321 = pneg %p229
      %p322 = pneg %p226
      %s323 = smul.u32 16, %s20
      %p324 = scmp.lt.s32.totalorder %s323, 31
      %s325 = scalar_select %p324, %s323, 31
      %s326 = smul.addr %s325, 8
      %s327 = scalar_lea.vmem %s8, %s326
      %s328 = smul.u32 16, %s20
      %p329 = scmp.lt.s32.totalorder %s328, 31
      %s330 = scalar_select %p329, %s328, 31
      %s331 = smul.addr %s330, 8
      %s332 = scalar_lea.vmem %s0, %s331
      %s333 = smul.u32 16, %s20
      %s334 = smul.u32 16, %s20
      %p335 = scmp.lt.s32.totalorder %s334, 31
      %s336 = scalar_select %p335, %s334, 31
      %s337 = smul.addr %s336, 8
      %s338 = scalar_lea.vmem %s1, %s337
      %s339 = smul.u32 16, %s20
      %s340 = smul.u32 16, %s20
      %p341 = scmp.lt.s32.totalorder %s340, 31
      %s342 = scalar_select %p341, %s340, 31
      %s343 = smul.addr %s342, 8
      %s344 = scalar_lea.vmem %s6, %s343
      %s345 = smul.u32 16, %s20
      %s346 = smul.u32 16, %s20
      %p347 = scmp.lt.s32.totalorder %s346, 31
      %s348 = scalar_select %p347, %s346, 31
      %s349 = smul.addr %s348, 8
      %s350 = scalar_lea.vmem %s7, %s349
      %s351 = smul.u32 16, %s20
      %s352 = smul.u32 16, %s20
      %p353 = scmp.lt.s32.totalorder %s352, 31
      %s354 = scalar_select %p353, %s352, 31
      %s355 = smul.addr %s354, 8
      %s356 = scalar_lea.vmem %s8, %s355
      %s357 = smul.u32 16, %s20
      %v358 = vld [vmem:[%s332] sm:$0xff]
      %v359 = vld [vmem:[%s332 + $0x8] sm:$0xff]
      %v360 = vld [vmem:[%s332 + $0x10] sm:$0xff]
      %v361 = vld [vmem:[%s332 + $0x18] sm:$0xff]
      %v362 = vld [vmem:[%s332 + $0x20] sm:$0xff]
      %v363 = vld [vmem:[%s332 + $0x28] sm:$0xff]
      %v364 = vld [vmem:[%s332 + $0x30] sm:$0xff]
      %v365 = vld [vmem:[%s332 + $0x38] sm:$0xff]
      %v366 = vld [vmem:[%s332 + $0x40] sm:$0xff]
      %v367 = vld [vmem:[%s332 + $0x48] sm:$0xff]
      %v368 = vld [vmem:[%s332 + $0x50] sm:$0xff]
      %v369 = vld [vmem:[%s332 + $0x58] sm:$0xff]
      %v370 = vld [vmem:[%s332 + $0x60] sm:$0xff]
      %v371 = vld [vmem:[%s332 + $0x68] sm:$0xff]
      %v372 = vld [vmem:[%s332 + $0x70] sm:$0xff]
      %v373 = vld [vmem:[%s332 + $0x78] sm:$0xff]
      %v374 = vld [vmem:[%s2] sm:$0xff]
      %v375 = vld [vmem:[%s2 + $0x8] sm:$0xff]
      %v376 = vld [vmem:[%s2 + $0x10] sm:$0xff]
      %v377 = vld [vmem:[%s2 + $0x18] sm:$0xff]
      %v378 = vld [vmem:[%s3] sm:$0x1]
      %v380 = vlaneseq
      %v381 = vshrl.u32 %v380, 7
      %v382 = vsub.s32 0, %v381
      %v383 = vrot.slane %v378, %v382
      %vm385 = vcmask 261120
      %v387 = vsel %vm385, %v358, 0
      %v390 = vsel %vm385, %v359, 0
      %v393 = vsel %vm385, %v360, 0
      %v396 = vsel %vm385, %v361, 0
      %v399 = vsel %vm385, %v362, 0
      %v402 = vsel %vm385, %v363, 0
      %v405 = vsel %vm385, %v364, 0
      %v408 = vsel %vm385, %v365, 0
      %v411 = vsel %vm385, %v366, 0
      %v414 = vsel %vm385, %v367, 0
      %v417 = vsel %vm385, %v368, 0
      %v420 = vsel %vm385, %v369, 0
      %v423 = vsel %vm385, %v370, 0
      %v426 = vsel %vm385, %v371, 0
      %v429 = vsel %vm385, %v372, 0
      %v432 = vsel %vm385, %v373, 0
      %434 = vmatprep.subr.mxu0 0.0
      %435 = vmatpush1.msra.mxu0 0.0
      %436 = vmatprep.subr.mxu0 0.0
      %437 = vmatpush1.msra.mxu0 0.0
      %438 = vmatprep.subr.mxu0 0.0
      %439 = vmatpush1.msra.mxu0 0.0
      %440 = vmatprep.subr.mxu0 0.0
      %441 = vmatpush1.msra.mxu0 0.0
      %442 = vmatprep.subr.mxu0 0.0
      %443 = vmatpush1.msra.mxu0 0.0
      %444 = vmatprep.subr.mxu0 0.0
      %445 = vmatpush1.msra.mxu0 0.0
      %446 = vmatprep.subr.mxu0 0.0
      %447 = vmatpush1.msra.mxu0 0.0
      %448 = vmatprep.subr.mxu0 0.0
      %449 = vmatpush1.msra.mxu0 0.0
      %450 = vmatprep.subr.mxu0 0.0
      %451 = vmatpush1.msra.mxu0 0.0
      %452 = vmatprep.subr.mxu0 0.0
      %453 = vmatpush1.msra.mxu0 0.0
      %454 = vmatprep.subr.mxu0 0.0
      %455 = vmatpush1.msra.mxu0 0.0
      %456 = vmatprep.subr.mxu0 0.0
      %457 = vmatpush1.msra.mxu0 0.0
      %458 = vmatprep.subr.mxu0 0.0
      %459 = vmatpush1.msra.mxu0 %v377
      %460 = vmatprep.subr.mxu0 0.0
      %461 = vmatpush1.msra.mxu0 %v376
      %462 = vmatprep.subr.mxu0 0.0
      %463 = vmatpush1.msra.mxu0 %v375
      %464 = vmatprep.subr.mxu0 0.0
      %465 = vmatpush1.msra.mxu0 %v374
      %466 = vmatprep.subr.mxu0 0.0
      %467 = vmatpush2.msra.mxu0 0.0
      %468 = vmatprep.subr.mxu0 0.0
      %469 = vmatpush2.msra.mxu0 0.0
      %470 = vmatprep.subr.mxu0 0.0
      %471 = vmatpush2.msra.mxu0 0.0
      %472 = vmatprep.subr.mxu0 0.0
      %473 = vmatpush2.msra.mxu0 0.0
      %474 = vmatprep.subr.mxu0 0.0
      %475 = vmatpush2.msra.mxu0 0.0
      %476 = vmatprep.subr.mxu0 0.0
      %477 = vmatpush2.msra.mxu0 0.0
      %478 = vmatprep.subr.mxu0 0.0
      %479 = vmatpush2.msra.mxu0 0.0
      %480 = vmatprep.subr.mxu0 0.0
      %481 = vmatpush2.msra.mxu0 0.0
      %482 = vmatprep.subr.mxu0 0.0
      %483 = vmatpush2.msra.mxu0 0.0
      %484 = vmatprep.subr.mxu0 0.0
      %485 = vmatpush2.msra.mxu0 0.0
      %486 = vmatprep.subr.mxu0 0.0
      %487 = vmatpush2.msra.mxu0 0.0
      %488 = vmatprep.subr.mxu0 0.0
      %489 = vmatpush2.msra.mxu0 0.0
      %490 = vmatprep.subr.mxu0 0.0
      %491 = vmatpush2.msra.mxu0 0.0
      %492 = vmatprep.subr.mxu0 0.0
      %493 = vmatpush2.msra.mxu0 0.0
      %494 = vmatprep.subr.mxu0 0.0
      %495 = vmatpush2.msra.mxu0 0.0
      %496 = vmatprep.subr.mxu0 0.0
      %497 = vmatpush2.msra.mxu0 0.0
      %498 = vmatprep.mubr.f32.mxu0 0.0
      %499 = vmatmul.mubr.f32.gmra.mxu0 %v387
      %v500 = vpop.f32.mrf.mxu0
      %v501 = vadd.f32 %v383, %v500
      %v502 = vpop.f32.mrf.mxu0
      %503 = vmatprep.mubr.f32.mxu0 0.0
      %504 = vmatmul.mubr.f32.gmra.mxu0 %v390
      %v505 = vpop.f32.mrf.mxu0
      %v506 = vadd.f32 %v383, %v505
      %v507 = vpop.f32.mrf.mxu0
      %508 = vmatprep.mubr.f32.mxu0 0.0
      %509 = vmatmul.mubr.f32.gmra.mxu0 %v393
      %v510 = vpop.f32.mrf.mxu0
      %v511 = vadd.f32 %v383, %v510
      %v512 = vpop.f32.mrf.mxu0
      %513 = vmatprep.mubr.f32.mxu0 0.0
      %514 = vmatmul.mubr.f32.gmra.mxu0 %v396
      %v515 = vpop.f32.mrf.mxu0
      %v516 = vadd.f32 %v383, %v515
      %v517 = vpop.f32.mrf.mxu0
      %518 = vmatprep.mubr.f32.mxu0 0.0
      %519 = vmatmul.mubr.f32.gmra.mxu0 %v399
      %v520 = vpop.f32.mrf.mxu0
      %v521 = vadd.f32 %v383, %v520
      %v522 = vpop.f32.mrf.mxu0
      %523 = vmatprep.mubr.f32.mxu0 0.0
      %524 = vmatmul.mubr.f32.gmra.mxu0 %v402
      %v525 = vpop.f32.mrf.mxu0
      %v526 = vadd.f32 %v383, %v525
      %v527 = vpop.f32.mrf.mxu0
      %528 = vmatprep.mubr.f32.mxu0 0.0
      %529 = vmatmul.mubr.f32.gmra.mxu0 %v405
      %v530 = vpop.f32.mrf.mxu0
      %v531 = vadd.f32 %v383, %v530
      %v532 = vpop.f32.mrf.mxu0
      %533 = vmatprep.mubr.f32.mxu0 0.0
      %534 = vmatmul.mubr.f32.gmra.mxu0 %v408
      %v535 = vpop.f32.mrf.mxu0
      %v536 = vadd.f32 %v383, %v535
      %v537 = vpop.f32.mrf.mxu0
      %538 = vmatprep.mubr.f32.mxu0 0.0
      %539 = vmatmul.mubr.f32.gmra.mxu0 %v411
      %v540 = vpop.f32.mrf.mxu0
      %v541 = vadd.f32 %v383, %v540
      %v542 = vpop.f32.mrf.mxu0
      %543 = vmatprep.mubr.f32.mxu0 0.0
      %544 = vmatmul.mubr.f32.gmra.mxu0 %v414
      %v545 = vpop.f32.mrf.mxu0
      %v546 = vadd.f32 %v383, %v545
      %v547 = vpop.f32.mrf.mxu0
      %548 = vmatprep.mubr.f32.mxu0 0.0
      %549 = vmatmul.mubr.f32.gmra.mxu0 %v417
      %v550 = vpop.f32.mrf.mxu0
      %v551 = vadd.f32 %v383, %v550
      %v552 = vpop.f32.mrf.mxu0
      %553 = vmatprep.mubr.f32.mxu0 0.0
      %554 = vmatmul.mubr.f32.gmra.mxu0 %v420
      %v555 = vpop.f32.mrf.mxu0
      %v556 = vadd.f32 %v383, %v555
      %v557 = vpop.f32.mrf.mxu0
      %558 = vmatprep.mubr.f32.mxu0 0.0
      %559 = vmatmul.mubr.f32.gmra.mxu0 %v423
      %v560 = vpop.f32.mrf.mxu0
      %v561 = vadd.f32 %v383, %v560
      %v562 = vpop.f32.mrf.mxu0
      %563 = vmatprep.mubr.f32.mxu0 0.0
      %564 = vmatmul.mubr.f32.gmra.mxu0 %v426
      %v565 = vpop.f32.mrf.mxu0
      %v566 = vadd.f32 %v383, %v565
      %v567 = vpop.f32.mrf.mxu0
      %568 = vmatprep.mubr.f32.mxu0 0.0
      %569 = vmatmul.mubr.f32.gmra.mxu0 %v429
      %v570 = vpop.f32.mrf.mxu0
      %v571 = vadd.f32 %v383, %v570
      %v572 = vpop.f32.mrf.mxu0
      %573 = vmatprep.mubr.f32.mxu0 0.0
      %574 = vmatmul.mubr.f32.gmra.mxu0 %v432
      %v575 = vpop.f32.mrf.mxu0
      %v576 = vadd.f32 %v383, %v575
      %v577 = vpop.f32.mrf.mxu0
      %578 = vdwg.mxu0
      %v579 = vtanh.pop %v501
      %v580 = vtanh.pop %v506
      %v581 = vtanh.pop %v511
      %v582 = vtanh.pop %v516
      %v583 = vtanh.pop %v521
      %v584 = vtanh.pop %v526
      %v585 = vtanh.pop %v531
      %v586 = vtanh.pop %v536
      %v587 = vtanh.pop %v541
      %v588 = vtanh.pop %v546
      %v589 = vtanh.pop %v551
      %v590 = vtanh.pop %v556
      %v591 = vtanh.pop %v561
      %v592 = vtanh.pop %v566
      %v593 = vtanh.pop %v571
      %v594 = vtanh.pop %v576
      %v595 = vld [vmem:[%s4] sm:$0xff]
      %v596 = vld [vmem:[%s4 + $0x8] sm:$0xff]
      %v597 = vld [vmem:[%s4 + $0x10] sm:$0xff]
      %v598 = vld [vmem:[%s4 + $0x18] sm:$0xff]
      %v599 = vld [vmem:[%s5] sm:$0x1]
      %v601 = vlaneseq
      %v602 = vshrl.u32 %v601, 7
      %v603 = vsub.s32 0, %v602
      %v604 = vrot.slane %v599, %v603
      %v607 = vsel %vm385, %v579, 0
      %v610 = vsel %vm385, %v580, 0
      %v613 = vsel %vm385, %v581, 0
      %v616 = vsel %vm385, %v582, 0
      %v619 = vsel %vm385, %v583, 0
      %v622 = vsel %vm385, %v584, 0
      %v625 = vsel %vm385, %v585, 0
      %v628 = vsel %vm385, %v586, 0
      %v631 = vsel %vm385, %v587, 0
      %v634 = vsel %vm385, %v588, 0
      %v637 = vsel %vm385, %v589, 0
      %v640 = vsel %vm385, %v590, 0
      %v643 = vsel %vm385, %v591, 0
      %v646 = vsel %vm385, %v592, 0
      %v649 = vsel %vm385, %v593, 0
      %v652 = vsel %vm385, %v594, 0
      %654 = vmatprep.subr.mxu0 0.0
      %655 = vmatpush1.msra.mxu0 0.0
      %656 = vmatprep.subr.mxu0 0.0
      %657 = vmatpush1.msra.mxu0 0.0
      %658 = vmatprep.subr.mxu0 0.0
      %659 = vmatpush1.msra.mxu0 0.0
      %660 = vmatprep.subr.mxu0 0.0
      %661 = vmatpush1.msra.mxu0 0.0
      %662 = vmatprep.subr.mxu0 0.0
      %663 = vmatpush1.msra.mxu0 0.0
      %664 = vmatprep.subr.mxu0 0.0
      %665 = vmatpush1.msra.mxu0 0.0
      %666 = vmatprep.subr.mxu0 0.0
      %667 = vmatpush1.msra.mxu0 0.0
      %668 = vmatprep.subr.mxu0 0.0
      %669 = vmatpush1.msra.mxu0 0.0
      %670 = vmatprep.subr.mxu0 0.0
      %671 = vmatpush1.msra.mxu0 0.0
      %672 = vmatprep.subr.mxu0 0.0
      %673 = vmatpush1.msra.mxu0 0.0
      %674 = vmatprep.subr.mxu0 0.0
      %675 = vmatpush1.msra.mxu0 0.0
      %676 = vmatprep.subr.mxu0 0.0
      %677 = vmatpush1.msra.mxu0 0.0
      %678 = vmatprep.subr.mxu0 0.0
      %679 = vmatpush1.msra.mxu0 %v598
      %680 = vmatprep.subr.mxu0 0.0
      %681 = vmatpush1.msra.mxu0 %v597
      %682 = vmatprep.subr.mxu0 0.0
      %683 = vmatpush1.msra.mxu0 %v596
      %684 = vmatprep.subr.mxu0 0.0
      %685 = vmatpush1.msra.mxu0 %v595
      %686 = vmatprep.subr.mxu0 0.0
      %687 = vmatpush2.msra.mxu0 0.0
      %688 = vmatprep.subr.mxu0 0.0
      %689 = vmatpush2.msra.mxu0 0.0
      %690 = vmatprep.subr.mxu0 0.0
      %691 = vmatpush2.msra.mxu0 0.0
      %692 = vmatprep.subr.mxu0 0.0
      %693 = vmatpush2.msra.mxu0 0.0
      %694 = vmatprep.subr.mxu0 0.0
      %695 = vmatpush2.msra.mxu0 0.0
      %696 = vmatprep.subr.mxu0 0.0
      %697 = vmatpush2.msra.mxu0 0.0
      %698 = vmatprep.subr.mxu0 0.0
      %699 = vmatpush2.msra.mxu0 0.0
      %700 = vmatprep.subr.mxu0 0.0
      %701 = vmatpush2.msra.mxu0 0.0
      %702 = vmatprep.subr.mxu0 0.0
      %703 = vmatpush2.msra.mxu0 0.0
      %704 = vmatprep.subr.mxu0 0.0
      %705 = vmatpush2.msra.mxu0 0.0
      %706 = vmatprep.subr.mxu0 0.0
      %707 = vmatpush2.msra.mxu0 0.0
      %708 = vmatprep.subr.mxu0 0.0
      %709 = vmatpush2.msra.mxu0 0.0
      %710 = vmatprep.subr.mxu0 0.0
      %711 = vmatpush2.msra.mxu0 0.0
      %712 = vmatprep.subr.mxu0 0.0
      %713 = vmatpush2.msra.mxu0 0.0
      %714 = vmatprep.subr.mxu0 0.0
      %715 = vmatpush2.msra.mxu0 0.0
      %716 = vmatprep.subr.mxu0 0.0
      %717 = vmatpush2.msra.mxu0 0.0
      %718 = vmatprep.mubr.f32.mxu0 0.0
      %719 = vmatmul.mubr.f32.gmra.mxu0 %v607
      %v720 = vpop.f32.mrf.mxu0
      %v721 = vadd.f32 %v604, %v720
      %v722 = vpop.f32.mrf.mxu0
      %723 = vmatprep.mubr.f32.mxu0 0.0
      %724 = vmatmul.mubr.f32.gmra.mxu0 %v610
      %v725 = vpop.f32.mrf.mxu0
      %v726 = vadd.f32 %v604, %v725
      %v727 = vpop.f32.mrf.mxu0
      %728 = vmatprep.mubr.f32.mxu0 0.0
      %729 = vmatmul.mubr.f32.gmra.mxu0 %v613
      %v730 = vpop.f32.mrf.mxu0
      %v731 = vadd.f32 %v604, %v730
      %v732 = vpop.f32.mrf.mxu0
      %733 = vmatprep.mubr.f32.mxu0 0.0
      %734 = vmatmul.mubr.f32.gmra.mxu0 %v616
      %v735 = vpop.f32.mrf.mxu0
      %v736 = vadd.f32 %v604, %v735
      %v737 = vpop.f32.mrf.mxu0
      %738 = vmatprep.mubr.f32.mxu0 0.0
      %739 = vmatmul.mubr.f32.gmra.mxu0 %v619
      %v740 = vpop.f32.mrf.mxu0
      %v741 = vadd.f32 %v604, %v740
      %v742 = vpop.f32.mrf.mxu0
      %743 = vmatprep.mubr.f32.mxu0 0.0
      %744 = vmatmul.mubr.f32.gmra.mxu0 %v622
      %v745 = vpop.f32.mrf.mxu0
      %v746 = vadd.f32 %v604, %v745
      %v747 = vpop.f32.mrf.mxu0
      %748 = vmatprep.mubr.f32.mxu0 0.0
      %749 = vmatmul.mubr.f32.gmra.mxu0 %v625
      %v750 = vpop.f32.mrf.mxu0
      %v751 = vadd.f32 %v604, %v750
      %v752 = vpop.f32.mrf.mxu0
      %753 = vmatprep.mubr.f32.mxu0 0.0
      %754 = vmatmul.mubr.f32.gmra.mxu0 %v628
      %v755 = vpop.f32.mrf.mxu0
      %v756 = vadd.f32 %v604, %v755
      %v757 = vpop.f32.mrf.mxu0
      %758 = vmatprep.mubr.f32.mxu0 0.0
      %759 = vmatmul.mubr.f32.gmra.mxu0 %v631
      %v760 = vpop.f32.mrf.mxu0
      %v761 = vadd.f32 %v604, %v760
      %v762 = vpop.f32.mrf.mxu0
      %763 = vmatprep.mubr.f32.mxu0 0.0
      %764 = vmatmul.mubr.f32.gmra.mxu0 %v634
      %v765 = vpop.f32.mrf.mxu0
      %v766 = vadd.f32 %v604, %v765
      %v767 = vpop.f32.mrf.mxu0
      %768 = vmatprep.mubr.f32.mxu0 0.0
      %769 = vmatmul.mubr.f32.gmra.mxu0 %v637
      %v770 = vpop.f32.mrf.mxu0
      %v771 = vadd.f32 %v604, %v770
      %v772 = vpop.f32.mrf.mxu0
      %773 = vmatprep.mubr.f32.mxu0 0.0
      %774 = vmatmul.mubr.f32.gmra.mxu0 %v640
      %v775 = vpop.f32.mrf.mxu0
      %v776 = vadd.f32 %v604, %v775
      %v777 = vpop.f32.mrf.mxu0
      %778 = vmatprep.mubr.f32.mxu0 0.0
      %779 = vmatmul.mubr.f32.gmra.mxu0 %v643
      %v780 = vpop.f32.mrf.mxu0
      %v781 = vadd.f32 %v604, %v780
      %v782 = vpop.f32.mrf.mxu0
      %783 = vmatprep.mubr.f32.mxu0 0.0
      %784 = vmatmul.mubr.f32.gmra.mxu0 %v646
      %v785 = vpop.f32.mrf.mxu0
      %v786 = vadd.f32 %v604, %v785
      %v787 = vpop.f32.mrf.mxu0
      %788 = vmatprep.mubr.f32.mxu0 0.0
      %789 = vmatmul.mubr.f32.gmra.mxu0 %v649
      %v790 = vpop.f32.mrf.mxu0
      %v791 = vadd.f32 %v604, %v790
      %v792 = vpop.f32.mrf.mxu0
      %793 = vmatprep.mubr.f32.mxu0 0.0
      %794 = vmatmul.mubr.f32.gmra.mxu0 %v652
      %v795 = vpop.f32.mrf.mxu0
      %v796 = vadd.f32 %v604, %v795
      %v797 = vpop.f32.mrf.mxu0
      %798 = vdwg.mxu0
      %799 = vst [vmem:[%s344] sm:$0xff] %v721
      %800 = vst [vmem:[%s344 + $0x8] sm:$0xff] %v726
      %801 = vst [vmem:[%s344 + $0x10] sm:$0xff] %v731
      %802 = vst [vmem:[%s344 + $0x18] sm:$0xff] %v736
      %803 = vst [vmem:[%s344 + $0x20] sm:$0xff] %v741
      %804 = vst [vmem:[%s344 + $0x28] sm:$0xff] %v746
      %805 = vst [vmem:[%s344 + $0x30] sm:$0xff] %v751
      %806 = vst [vmem:[%s344 + $0x38] sm:$0xff] %v756
      %807 = vst [vmem:[%s344 + $0x40] sm:$0xff] %v761
      %808 = vst [vmem:[%s344 + $0x48] sm:$0xff] %v766
      %809 = vst [vmem:[%s344 + $0x50] sm:$0xff] %v771
      %810 = vst [vmem:[%s344 + $0x58] sm:$0xff] %v776
      %811 = vst [vmem:[%s344 + $0x60] sm:$0xff] %v781
      %812 = vst [vmem:[%s344 + $0x68] sm:$0xff] %v786
      %813 = vst [vmem:[%s344 + $0x70] sm:$0xff] %v791
      %814 = vst [vmem:[%s344 + $0x78] sm:$0xff] %v796
      %v815 = vld [vmem:[%s338] sm:$0xff]
      %v816 = vld [vmem:[%s338 + $0x8] sm:$0xff]
      %v817 = vld [vmem:[%s338 + $0x10] sm:$0xff]
      %v818 = vld [vmem:[%s338 + $0x18] sm:$0xff]
      %v819 = vld [vmem:[%s338 + $0x20] sm:$0xff]
      %v820 = vld [vmem:[%s338 + $0x28] sm:$0xff]
      %v821 = vld [vmem:[%s338 + $0x30] sm:$0xff]
      %v822 = vld [vmem:[%s338 + $0x38] sm:$0xff]
      %v823 = vld [vmem:[%s338 + $0x40] sm:$0xff]
      %v824 = vld [vmem:[%s338 + $0x48] sm:$0xff]
      %v825 = vld [vmem:[%s338 + $0x50] sm:$0xff]
      %v826 = vld [vmem:[%s338 + $0x58] sm:$0xff]
      %v827 = vld [vmem:[%s338 + $0x60] sm:$0xff]
      %v828 = vld [vmem:[%s338 + $0x68] sm:$0xff]
      %v829 = vld [vmem:[%s338 + $0x70] sm:$0xff]
      %v830 = vld [vmem:[%s338 + $0x78] sm:$0xff]
      %vm831 = vcmp.ne.s32.totalorder %v815, 0
      %vm832 = vcmp.ne.s32.totalorder %v816, 0
      %vm833 = vcmp.ne.s32.totalorder %v817, 0
      %vm834 = vcmp.ne.s32.totalorder %v818, 0
      %vm835 = vcmp.ne.s32.totalorder %v819, 0
      %vm836 = vcmp.ne.s32.totalorder %v820, 0
      %vm837 = vcmp.ne.s32.totalorder %v821, 0
      %vm838 = vcmp.ne.s32.totalorder %v822, 0
      %vm839 = vcmp.ne.s32.totalorder %v823, 0
      %vm840 = vcmp.ne.s32.totalorder %v824, 0
      %vm841 = vcmp.ne.s32.totalorder %v825, 0
      %vm842 = vcmp.ne.s32.totalorder %v826, 0
      %vm843 = vcmp.ne.s32.totalorder %v827, 0
      %vm844 = vcmp.ne.s32.totalorder %v828, 0
      %vm845 = vcmp.ne.s32.totalorder %v829, 0
      %vm846 = vcmp.ne.s32.totalorder %v830, 0
      %v847 = vsel %vm831, %v721, -3.4028235e+38
      %v848 = vsel %vm832, %v726, -3.4028235e+38
      %v849 = vsel %vm833, %v731, -3.4028235e+38
      %v850 = vsel %vm834, %v736, -3.4028235e+38
      %v851 = vsel %vm835, %v741, -3.4028235e+38
      %v852 = vsel %vm836, %v746, -3.4028235e+38
      %v853 = vsel %vm837, %v751, -3.4028235e+38
      %v854 = vsel %vm838, %v756, -3.4028235e+38
      %v855 = vsel %vm839, %v761, -3.4028235e+38
      %v856 = vsel %vm840, %v766, -3.4028235e+38
      %v857 = vsel %vm841, %v771, -3.4028235e+38
      %v858 = vsel %vm842, %v776, -3.4028235e+38
      %v859 = vsel %vm843, %v781, -3.4028235e+38
      %v860 = vsel %vm844, %v786, -3.4028235e+38
      %v861 = vsel %vm845, %v791, -3.4028235e+38
      %v862 = vsel %vm846, %v796, -3.4028235e+38
      %863 = vmax.xlane.f32.xlu0 %v847
      %v864 = vpop.xlane.xlu0 %863
      %865 = vmax.xlane.f32.xlu0 %v848
      %v866 = vpop.xlane.xlu0 %865
      %867 = vmax.xlane.f32.xlu0 %v849
      %v868 = vpop.xlane.xlu0 %867
      %869 = vmax.xlane.f32.xlu0 %v850
      %v870 = vpop.xlane.xlu0 %869
      %871 = vmax.xlane.f32.xlu0 %v851
      %v872 = vpop.xlane.xlu0 %871
      %873 = vmax.xlane.f32.xlu0 %v852
      %v874 = vpop.xlane.xlu0 %873
      %875 = vmax.xlane.f32.xlu0 %v853
      %v876 = vpop.xlane.xlu0 %875
      %877 = vmax.xlane.f32.xlu0 %v854
      %v878 = vpop.xlane.xlu0 %877
      %879 = vmax.xlane.f32.xlu0 %v855
      %v880 = vpop.xlane.xlu0 %879
      %881 = vmax.xlane.f32.xlu0 %v856
      %v882 = vpop.xlane.xlu0 %881
      %883 = vmax.xlane.f32.xlu0 %v857
      %v884 = vpop.xlane.xlu0 %883
      %885 = vmax.xlane.f32.xlu0 %v858
      %v886 = vpop.xlane.xlu0 %885
      %887 = vmax.xlane.f32.xlu0 %v859
      %v888 = vpop.xlane.xlu0 %887
      %889 = vmax.xlane.f32.xlu0 %v860
      %v890 = vpop.xlane.xlu0 %889
      %891 = vmax.xlane.f32.xlu0 %v861
      %v892 = vpop.xlane.xlu0 %891
      %893 = vmax.xlane.f32.xlu0 %v862
      %v894 = vpop.xlane.xlu0 %893
      %v895 = vsub.f32 %v847, %v864
      %v896 = vsub.f32 %v848, %v866
      %v897 = vsub.f32 %v849, %v868
      %v898 = vsub.f32 %v850, %v870
      %v899 = vsub.f32 %v851, %v872
      %v900 = vsub.f32 %v852, %v874
      %v901 = vsub.f32 %v853, %v876
      %v902 = vsub.f32 %v854, %v878
      %v903 = vsub.f32 %v855, %v880
      %v904 = vsub.f32 %v856, %v882
      %v905 = vsub.f32 %v857, %v884
      %v906 = vsub.f32 %v858, %v886
      %v907 = vsub.f32 %v859, %v888
      %v908 = vsub.f32 %v860, %v890
      %v909 = vsub.f32 %v861, %v892
      %v910 = vsub.f32 %v862, %v894
      %v911 = vmul.f32 %v895, 1.442695
      %v912 = vpow.pop %v911
      %v913 = vmul.f32 %v896, 1.442695
      %v914 = vpow.pop %v913
      %v915 = vmul.f32 %v897, 1.442695
      %v916 = vpow.pop %v915
      %v917 = vmul.f32 %v898, 1.442695
      %v918 = vpow.pop %v917
      %v919 = vmul.f32 %v899, 1.442695
      %v920 = vpow.pop %v919
      %v921 = vmul.f32 %v900, 1.442695
      %v922 = vpow.pop %v921
      %v923 = vmul.f32 %v901, 1.442695
      %v924 = vpow.pop %v923
      %v925 = vmul.f32 %v902, 1.442695
      %v926 = vpow.pop %v925
      %v927 = vmul.f32 %v903, 1.442695
      %v928 = vpow.pop %v927
      %v929 = vmul.f32 %v904, 1.442695
      %v930 = vpow.pop %v929
      %v931 = vmul.f32 %v905, 1.442695
      %v932 = vpow.pop %v931
      %v933 = vmul.f32 %v906, 1.442695
      %v934 = vpow.pop %v933
      %v935 = vmul.f32 %v907, 1.442695
      %v936 = vpow.pop %v935
      %v937 = vmul.f32 %v908, 1.442695
      %v938 = vpow.pop %v937
      %v939 = vmul.f32 %v909, 1.442695
      %v940 = vpow.pop %v939
      %v941 = vmul.f32 %v910, 1.442695
      %v942 = vpow.pop %v941
      %943 = vadd.xlane.f32.xlu0 %v912
      %v944 = vpop.xlane.xlu0 %943
      %945 = vadd.xlane.f32.xlu0 %v914
      %v946 = vpop.xlane.xlu0 %945
      %947 = vadd.xlane.f32.xlu0 %v916
      %v948 = vpop.xlane.xlu0 %947
      %949 = vadd.xlane.f32.xlu0 %v918
      %v950 = vpop.xlane.xlu0 %949
      %951 = vadd.xlane.f32.xlu0 %v920
      %v952 = vpop.xlane.xlu0 %951
      %953 = vadd.xlane.f32.xlu0 %v922
      %v954 = vpop.xlane.xlu0 %953
      %955 = vadd.xlane.f32.xlu0 %v924
      %v956 = vpop.xlane.xlu0 %955
      %957 = vadd.xlane.f32.xlu0 %v926
      %v958 = vpop.xlane.xlu0 %957
      %959 = vadd.xlane.f32.xlu0 %v928
      %v960 = vpop.xlane.xlu0 %959
      %961 = vadd.xlane.f32.xlu0 %v930
      %v962 = vpop.xlane.xlu0 %961
      %963 = vadd.xlane.f32.xlu0 %v932
      %v964 = vpop.xlane.xlu0 %963
      %965 = vadd.xlane.f32.xlu0 %v934
      %v966 = vpop.xlane.xlu0 %965
      %967 = vadd.xlane.f32.xlu0 %v936
      %v968 = vpop.xlane.xlu0 %967
      %969 = vadd.xlane.f32.xlu0 %v938
      %v970 = vpop.xlane.xlu0 %969
      %971 = vadd.xlane.f32.xlu0 %v940
      %v972 = vpop.xlane.xlu0 %971
      %973 = vadd.xlane.f32.xlu0 %v942
      %v974 = vpop.xlane.xlu0 %973
      %v975 = vrcp.pop %v944
      %v976 = vmul.f32 %v912, %v975
      %v977 = vrcp.pop %v946
      %v978 = vmul.f32 %v914, %v977
      %v979 = vrcp.pop %v948
      %v980 = vmul.f32 %v916, %v979
      %v981 = vrcp.pop %v950
      %v982 = vmul.f32 %v918, %v981
      %v983 = vrcp.pop %v952
      %v984 = vmul.f32 %v920, %v983
      %v985 = vrcp.pop %v954
      %v986 = vmul.f32 %v922, %v985
      %v987 = vrcp.pop %v956
      %v988 = vmul.f32 %v924, %v987
      %v989 = vrcp.pop %v958
      %v990 = vmul.f32 %v926, %v989
      %v991 = vrcp.pop %v960
      %v992 = vmul.f32 %v928, %v991
      %v993 = vrcp.pop %v962
      %v994 = vmul.f32 %v930, %v993
      %v995 = vrcp.pop %v964
      %v996 = vmul.f32 %v932, %v995
      %v997 = vrcp.pop %v966
      %v998 = vmul.f32 %v934, %v997
      %v999 = vrcp.pop %v968
      %v1000 = vmul.f32 %v936, %v999
      %v1001 = vrcp.pop %v970
      %v1002 = vmul.f32 %v938, %v1001
      %v1003 = vrcp.pop %v972
      %v1004 = vmul.f32 %v940, %v1003
      %v1005 = vrcp.pop %v974
      %v1006 = vmul.f32 %v942, %v1005
      %1007 = vst [vmem:[%s350] sm:$0xff] %v976
      %1008 = vst [vmem:[%s350 + $0x8] sm:$0xff] %v978
      %1009 = vst [vmem:[%s350 + $0x10] sm:$0xff] %v980
      %1010 = vst [vmem:[%s350 + $0x18] sm:$0xff] %v982
      %1011 = vst [vmem:[%s350 + $0x20] sm:$0xff] %v984
      %1012 = vst [vmem:[%s350 + $0x28] sm:$0xff] %v986
      %1013 = vst [vmem:[%s350 + $0x30] sm:$0xff] %v988
      %1014 = vst [vmem:[%s350 + $0x38] sm:$0xff] %v990
      %1015 = vst [vmem:[%s350 + $0x40] sm:$0xff] %v992
      %1016 = vst [vmem:[%s350 + $0x48] sm:$0xff] %v994
      %1017 = vst [vmem:[%s350 + $0x50] sm:$0xff] %v996
      %1018 = vst [vmem:[%s350 + $0x58] sm:$0xff] %v998
      %1019 = vst [vmem:[%s350 + $0x60] sm:$0xff] %v1000
      %1020 = vst [vmem:[%s350 + $0x68] sm:$0xff] %v1002
      %1021 = vst [vmem:[%s350 + $0x70] sm:$0xff] %v1004
      %1022 = vst [vmem:[%s350 + $0x78] sm:$0xff] %v1006
      %v1023 = vlaneseq
      %v1024 = vand.u32 %v1023, 127
      %vm1025 = vcmp.eq.f32.partialorder %v847, %v864
      %vm1026 = vcmp.eq.f32.partialorder %v848, %v866
      %vm1027 = vcmp.eq.f32.partialorder %v849, %v868
      %vm1028 = vcmp.eq.f32.partialorder %v850, %v870
      %vm1029 = vcmp.eq.f32.partialorder %v851, %v872
      %vm1030 = vcmp.eq.f32.partialorder %v852, %v874
      %vm1031 = vcmp.eq.f32.partialorder %v853, %v876
      %vm1032 = vcmp.eq.f32.partialorder %v854, %v878
      %vm1033 = vcmp.eq.f32.partialorder %v855, %v880
      %vm1034 = vcmp.eq.f32.partialorder %v856, %v882
      %vm1035 = vcmp.eq.f32.partialorder %v857, %v884
      %vm1036 = vcmp.eq.f32.partialorder %v858, %v886
      %vm1037 = vcmp.eq.f32.partialorder %v859, %v888
      %vm1038 = vcmp.eq.f32.partialorder %v860, %v890
      %vm1039 = vcmp.eq.f32.partialorder %v861, %v892
      %vm1040 = vcmp.eq.f32.partialorder %v862, %v894
      %v1041 = vsel %vm1025, %v1024, 128
      %v1042 = vsel %vm1026, %v1024, 128
      %v1043 = vsel %vm1027, %v1024, 128
      %v1044 = vsel %vm1028, %v1024, 128
      %v1045 = vsel %vm1029, %v1024, 128
      %v1046 = vsel %vm1030, %v1024, 128
      %v1047 = vsel %vm1031, %v1024, 128
      %v1048 = vsel %vm1032, %v1024, 128
      %v1049 = vsel %vm1033, %v1024, 128
      %v1050 = vsel %vm1034, %v1024, 128
      %v1051 = vsel %vm1035, %v1024, 128
      %v1052 = vsel %vm1036, %v1024, 128
      %v1053 = vsel %vm1037, %v1024, 128
      %v1054 = vsel %vm1038, %v1024, 128
      %v1055 = vsel %vm1039, %v1024, 128
      %v1056 = vsel %vm1040, %v1024, 128
      %v1057 = vand.u32 %v1041, 65535
      %v1058 = vshra.s32 %v1041, 16
      %v1059 = vcvt.s32.f32 %v1057
      %v1060 = vcvt.s32.f32 %v1058
      %1061 = vmin.xlane.f32.xlu0 %v1060
      %v1062 = vpop.xlane.xlu0 %1061
      %vm1063 = vcmp.eq.f32.partialorder %v1060, %v1062
      %v1064 = vsel %vm1063, %v1059, inf
      %1065 = vmin.xlane.f32.xlu0 %v1064
      %v1066 = vpop.xlane.xlu0 %1065
      %v1067 = vcvt.f32.s32 %v1066
      %v1068 = vcvt.f32.s32 %v1062
      %v1069 = vshll.u32 %v1068, 16
      %v1070 = vadd.s32 %v1069, %v1067
      %v1071 = vand.u32 %v1042, 65535
      %v1072 = vshra.s32 %v1042, 16
      %v1073 = vcvt.s32.f32 %v1071
      %v1074 = vcvt.s32.f32 %v1072
      %1075 = vmin.xlane.f32.xlu0 %v1074
      %v1076 = vpop.xlane.xlu0 %1075
      %vm1077 = vcmp.eq.f32.partialorder %v1074, %v1076
      %v1078 = vsel %vm1077, %v1073, inf
      %1079 = vmin.xlane.f32.xlu0 %v1078
      %v1080 = vpop.xlane.xlu0 %1079
      %v1081 = vcvt.f32.s32 %v1080
      %v1082 = vcvt.f32.s32 %v1076
      %v1083 = vshll.u32 %v1082, 16
      %v1084 = vadd.s32 %v1083, %v1081
      %v1085 = vand.u32 %v1043, 65535
      %v1086 = vshra.s32 %v1043, 16
      %v1087 = vcvt.s32.f32 %v1085
      %v1088 = vcvt.s32.f32 %v1086
      %1089 = vmin.xlane.f32.xlu0 %v1088
      %v1090 = vpop.xlane.xlu0 %1089
      %vm1091 = vcmp.eq.f32.partialorder %v1088, %v1090
      %v1092 = vsel %vm1091, %v1087, inf
      %1093 = vmin.xlane.f32.xlu0 %v1092
      %v1094 = vpop.xlane.xlu0 %1093
      %v1095 = vcvt.f32.s32 %v1094
      %v1096 = vcvt.f32.s32 %v1090
      %v1097 = vshll.u32 %v1096, 16
      %v1098 = vadd.s32 %v1097, %v1095
      %v1099 = vand.u32 %v1044, 65535
      %v1100 = vshra.s32 %v1044, 16
      %v1101 = vcvt.s32.f32 %v1099
      %v1102 = vcvt.s32.f32 %v1100
      %1103 = vmin.xlane.f32.xlu0 %v1102
      %v1104 = vpop.xlane.xlu0 %1103
      %vm1105 = vcmp.eq.f32.partialorder %v1102, %v1104
      %v1106 = vsel %vm1105, %v1101, inf
      %1107 = vmin.xlane.f32.xlu0 %v1106
      %v1108 = vpop.xlane.xlu0 %1107
      %v1109 = vcvt.f32.s32 %v1108
      %v1110 = vcvt.f32.s32 %v1104
      %v1111 = vshll.u32 %v1110, 16
      %v1112 = vadd.s32 %v1111, %v1109
      %v1113 = vand.u32 %v1045, 65535
      %v1114 = vshra.s32 %v1045, 16
      %v1115 = vcvt.s32.f32 %v1113
      %v1116 = vcvt.s32.f32 %v1114
      %1117 = vmin.xlane.f32.xlu0 %v1116
      %v1118 = vpop.xlane.xlu0 %1117
      %vm1119 = vcmp.eq.f32.partialorder %v1116, %v1118
      %v1120 = vsel %vm1119, %v1115, inf
      %1121 = vmin.xlane.f32.xlu0 %v1120
      %v1122 = vpop.xlane.xlu0 %1121
      %v1123 = vcvt.f32.s32 %v1122
      %v1124 = vcvt.f32.s32 %v1118
      %v1125 = vshll.u32 %v1124, 16
      %v1126 = vadd.s32 %v1125, %v1123
      %v1127 = vand.u32 %v1046, 65535
      %v1128 = vshra.s32 %v1046, 16
      %v1129 = vcvt.s32.f32 %v1127
      %v1130 = vcvt.s32.f32 %v1128
      %1131 = vmin.xlane.f32.xlu0 %v1130
      %v1132 = vpop.xlane.xlu0 %1131
      %vm1133 = vcmp.eq.f32.partialorder %v1130, %v1132
      %v1134 = vsel %vm1133, %v1129, inf
      %1135 = vmin.xlane.f32.xlu0 %v1134
      %v1136 = vpop.xlane.xlu0 %1135
      %v1137 = vcvt.f32.s32 %v1136
      %v1138 = vcvt.f32.s32 %v1132
      %v1139 = vshll.u32 %v1138, 16
      %v1140 = vadd.s32 %v1139, %v1137
      %v1141 = vand.u32 %v1047, 65535
      %v1142 = vshra.s32 %v1047, 16
      %v1143 = vcvt.s32.f32 %v1141
      %v1144 = vcvt.s32.f32 %v1142
      %1145 = vmin.xlane.f32.xlu0 %v1144
      %v1146 = vpop.xlane.xlu0 %1145
      %vm1147 = vcmp.eq.f32.partialorder %v1144, %v1146
      %v1148 = vsel %vm1147, %v1143, inf
      %1149 = vmin.xlane.f32.xlu0 %v1148
      %v1150 = vpop.xlane.xlu0 %1149
      %v1151 = vcvt.f32.s32 %v1150
      %v1152 = vcvt.f32.s32 %v1146
      %v1153 = vshll.u32 %v1152, 16
      %v1154 = vadd.s32 %v1153, %v1151
      %v1155 = vand.u32 %v1048, 65535
      %v1156 = vshra.s32 %v1048, 16
      %v1157 = vcvt.s32.f32 %v1155
      %v1158 = vcvt.s32.f32 %v1156
      %1159 = vmin.xlane.f32.xlu0 %v1158
      %v1160 = vpop.xlane.xlu0 %1159
      %vm1161 = vcmp.eq.f32.partialorder %v1158, %v1160
      %v1162 = vsel %vm1161, %v1157, inf
      %1163 = vmin.xlane.f32.xlu0 %v1162
      %v1164 = vpop.xlane.xlu0 %1163
      %v1165 = vcvt.f32.s32 %v1164
      %v1166 = vcvt.f32.s32 %v1160
      %v1167 = vshll.u32 %v1166, 16
      %v1168 = vadd.s32 %v1167, %v1165
      %v1169 = vand.u32 %v1049, 65535
      %v1170 = vshra.s32 %v1049, 16
      %v1171 = vcvt.s32.f32 %v1169
      %v1172 = vcvt.s32.f32 %v1170
      %1173 = vmin.xlane.f32.xlu0 %v1172
      %v1174 = vpop.xlane.xlu0 %1173
      %vm1175 = vcmp.eq.f32.partialorder %v1172, %v1174
      %v1176 = vsel %vm1175, %v1171, inf
      %1177 = vmin.xlane.f32.xlu0 %v1176
      %v1178 = vpop.xlane.xlu0 %1177
      %v1179 = vcvt.f32.s32 %v1178
      %v1180 = vcvt.f32.s32 %v1174
      %v1181 = vshll.u32 %v1180, 16
      %v1182 = vadd.s32 %v1181, %v1179
      %v1183 = vand.u32 %v1050, 65535
      %v1184 = vshra.s32 %v1050, 16
      %v1185 = vcvt.s32.f32 %v1183
      %v1186 = vcvt.s32.f32 %v1184
      %1187 = vmin.xlane.f32.xlu0 %v1186
      %v1188 = vpop.xlane.xlu0 %1187
      %vm1189 = vcmp.eq.f32.partialorder %v1186, %v1188
      %v1190 = vsel %vm1189, %v1185, inf
      %1191 = vmin.xlane.f32.xlu0 %v1190
      %v1192 = vpop.xlane.xlu0 %1191
      %v1193 = vcvt.f32.s32 %v1192
      %v1194 = vcvt.f32.s32 %v1188
      %v1195 = vshll.u32 %v1194, 16
      %v1196 = vadd.s32 %v1195, %v1193
      %v1197 = vand.u32 %v1051, 65535
      %v1198 = vshra.s32 %v1051, 16
      %v1199 = vcvt.s32.f32 %v1197
      %v1200 = vcvt.s32.f32 %v1198
      %1201 = vmin.xlane.f32.xlu0 %v1200
      %v1202 = vpop.xlane.xlu0 %1201
      %vm1203 = vcmp.eq.f32.partialorder %v1200, %v1202
      %v1204 = vsel %vm1203, %v1199, inf
      %1205 = vmin.xlane.f32.xlu0 %v1204
      %v1206 = vpop.xlane.xlu0 %1205
      %v1207 = vcvt.f32.s32 %v1206
      %v1208 = vcvt.f32.s32 %v1202
      %v1209 = vshll.u32 %v1208, 16
      %v1210 = vadd.s32 %v1209, %v1207
      %v1211 = vand.u32 %v1052, 65535
      %v1212 = vshra.s32 %v1052, 16
      %v1213 = vcvt.s32.f32 %v1211
      %v1214 = vcvt.s32.f32 %v1212
      %1215 = vmin.xlane.f32.xlu0 %v1214
      %v1216 = vpop.xlane.xlu0 %1215
      %vm1217 = vcmp.eq.f32.partialorder %v1214, %v1216
      %v1218 = vsel %vm1217, %v1213, inf
      %1219 = vmin.xlane.f32.xlu0 %v1218
      %v1220 = vpop.xlane.xlu0 %1219
      %v1221 = vcvt.f32.s32 %v1220
      %v1222 = vcvt.f32.s32 %v1216
      %v1223 = vshll.u32 %v1222, 16
      %v1224 = vadd.s32 %v1223, %v1221
      %v1225 = vand.u32 %v1053, 65535
      %v1226 = vshra.s32 %v1053, 16
      %v1227 = vcvt.s32.f32 %v1225
      %v1228 = vcvt.s32.f32 %v1226
      %1229 = vmin.xlane.f32.xlu0 %v1228
      %v1230 = vpop.xlane.xlu0 %1229
      %vm1231 = vcmp.eq.f32.partialorder %v1228, %v1230
      %v1232 = vsel %vm1231, %v1227, inf
      %1233 = vmin.xlane.f32.xlu0 %v1232
      %v1234 = vpop.xlane.xlu0 %1233
      %v1235 = vcvt.f32.s32 %v1234
      %v1236 = vcvt.f32.s32 %v1230
      %v1237 = vshll.u32 %v1236, 16
      %v1238 = vadd.s32 %v1237, %v1235
      %v1239 = vand.u32 %v1054, 65535
      %v1240 = vshra.s32 %v1054, 16
      %v1241 = vcvt.s32.f32 %v1239
      %v1242 = vcvt.s32.f32 %v1240
      %1243 = vmin.xlane.f32.xlu0 %v1242
      %v1244 = vpop.xlane.xlu0 %1243
      %vm1245 = vcmp.eq.f32.partialorder %v1242, %v1244
      %v1246 = vsel %vm1245, %v1241, inf
      %1247 = vmin.xlane.f32.xlu0 %v1246
      %v1248 = vpop.xlane.xlu0 %1247
      %v1249 = vcvt.f32.s32 %v1248
      %v1250 = vcvt.f32.s32 %v1244
      %v1251 = vshll.u32 %v1250, 16
      %v1252 = vadd.s32 %v1251, %v1249
      %v1253 = vand.u32 %v1055, 65535
      %v1254 = vshra.s32 %v1055, 16
      %v1255 = vcvt.s32.f32 %v1253
      %v1256 = vcvt.s32.f32 %v1254
      %1257 = vmin.xlane.f32.xlu0 %v1256
      %v1258 = vpop.xlane.xlu0 %1257
      %vm1259 = vcmp.eq.f32.partialorder %v1256, %v1258
      %v1260 = vsel %vm1259, %v1255, inf
      %1261 = vmin.xlane.f32.xlu0 %v1260
      %v1262 = vpop.xlane.xlu0 %1261
      %v1263 = vcvt.f32.s32 %v1262
      %v1264 = vcvt.f32.s32 %v1258
      %v1265 = vshll.u32 %v1264, 16
      %v1266 = vadd.s32 %v1265, %v1263
      %v1267 = vand.u32 %v1056, 65535
      %v1268 = vshra.s32 %v1056, 16
      %v1269 = vcvt.s32.f32 %v1267
      %v1270 = vcvt.s32.f32 %v1268
      %1271 = vmin.xlane.f32.xlu0 %v1270
      %v1272 = vpop.xlane.xlu0 %1271
      %vm1273 = vcmp.eq.f32.partialorder %v1270, %v1272
      %v1274 = vsel %vm1273, %v1269, inf
      %1275 = vmin.xlane.f32.xlu0 %v1274
      %v1276 = vpop.xlane.xlu0 %1275
      %v1277 = vcvt.f32.s32 %v1276
      %v1278 = vcvt.f32.s32 %v1272
      %v1279 = vshll.u32 %v1278, 16
      %v1280 = vadd.s32 %v1279, %v1277
      %vm1281 = vcmask 7168
      %1282 = vst.msk [vmem:[%s356] sm:$0xff] %vm1281, %v1070
      %1283 = vst.msk [vmem:[%s356 + $0x8] sm:$0xff] %vm1281, %v1084
      %1284 = vst.msk [vmem:[%s356 + $0x10] sm:$0xff] %vm1281, %v1098
      %1285 = vst.msk [vmem:[%s356 + $0x18] sm:$0xff] %vm1281, %v1112
      %1286 = vst.msk [vmem:[%s356 + $0x20] sm:$0xff] %vm1281, %v1126
      %1287 = vst.msk [vmem:[%s356 + $0x28] sm:$0xff] %vm1281, %v1140
      %1288 = vst.msk [vmem:[%s356 + $0x30] sm:$0xff] %vm1281, %v1154
      %1289 = vst.msk [vmem:[%s356 + $0x38] sm:$0xff] %vm1281, %v1168
      %1290 = vst.msk [vmem:[%s356 + $0x40] sm:$0xff] %vm1281, %v1182
      %1291 = vst.msk [vmem:[%s356 + $0x48] sm:$0xff] %vm1281, %v1196
      %1292 = vst.msk [vmem:[%s356 + $0x50] sm:$0xff] %vm1281, %v1210
      %1293 = vst.msk [vmem:[%s356 + $0x58] sm:$0xff] %vm1281, %v1224
      %1294 = vst.msk [vmem:[%s356 + $0x60] sm:$0xff] %vm1281, %v1238
      %1295 = vst.msk [vmem:[%s356 + $0x68] sm:$0xff] %vm1281, %v1252
      %1296 = vst.msk [vmem:[%s356 + $0x70] sm:$0xff] %vm1281, %v1266
      %1297 = vst.msk [vmem:[%s356 + $0x78] sm:$0xff] %vm1281, %v1280
      %s1298 = smul.u32 16, %s20
      %p1299 = scmp.lt.s32.totalorder %s1298, 31
      %s1300 = scalar_select %p1299, %s1298, 31
      %s1301 = smul.addr %s1300, 8
      %s1302 = scalar_lea.vmem %s6, %s1301
      %s1303 = smul.u32 16, %s20
      %p1304 = scmp.lt.s32.totalorder %s1303, 31
      %s1305 = scalar_select %p1304, %s1303, 31
      %s1306 = smul.addr %s1305, 8
      %s1307 = scalar_lea.vmem %s7, %s1306
      %s1308 = smul.u32 16, %s20
      %p1309 = scmp.lt.s32.totalorder %s1308, 31
      %s1310 = scalar_select %p1309, %s1308, 31
      %s1311 = smul.addr %s1310, 8
      %s1312 = scalar_lea.vmem %s8, %s1311
      // Predicated region
      $region45: #{jit_model_fused.1} parent=43 // pred_check
        %p1313 = pneg %p174
      $region46: #{jit_model_fused.1} parent=43 // pred_check_branch
        %1315 = sbr.rel (%p1313) target = $region48
      $region47: #{jit_model_fused.1} parent=43 // pred_region
        %s1316 = smul.u32 16, %s20
      $region48: #{jit_model_fused.1} parent=43 // pred_fallthru
        _
      // Predicated region
      $region49: #{jit_model_fused.1} parent=43 // pred_check
        %p1317 = pneg %p200
      $region50: #{jit_model_fused.1} parent=43 // pred_check_branch
        %1319 = sbr.rel (%p1317) target = $region52
      $region51: #{jit_model_fused.1} parent=43 // pred_region
        %s1320 = smul.u32 16, %s20
      $region52: #{jit_model_fused.1} parent=43 // pred_fallthru
        _
      // Predicated region
      $region53: #{jit_model_fused.1} parent=43 // pred_check
        %p1321 = pneg %p226
      $region54: #{jit_model_fused.1} parent=43 // pred_check_branch
        %1323 = sbr.rel (%p1321) target = $region56
      $region55: #{jit_model_fused.1} parent=43 // pred_region
        %s1324 = smul.u32 16, %s20
      $region56: #{jit_model_fused.1} parent=43 // pred_fallthru
        _
    $region44: #{jit_model_fused.1} parent=5 // pred_fallthru
      _
    %p1325 = scmp.le.s32.totalorder 2, %s15
    // Predicated region
    $region57: #{jit_model_fused.1} parent=5 // pred_check
      %p1326 = pneg %p1325
    $region58: #{jit_model_fused.1} parent=5 // pred_check_branch
      %1328 = sbr.rel (%p1326) target = $region60
    $region59: #{jit_model_fused.1} parent=5 // pred_region
      %s1329 = ssub.s32 %s15, 2
      // Predicated region
      $region61: #{jit_model_fused.1} parent=59 // pred_check
        %p1330 = pneg %p180
      $region62: #{jit_model_fused.1} parent=59 // pred_check_branch
        %1332 = sbr.rel (%p1330) target = $region64
      $region63: #{jit_model_fused.1} parent=59 // pred_region
        %s1333 = smul.u32 16, %s21
        %p1334 = scmp.lt.s32.totalorder %s1333, 31
        %s1335 = scalar_select %p1334, %s1333, 31
        %s1336 = smul.addr %s1335, 8
        %s1337 = scalar_lea.vmem %s6, %s1336
      $region64: #{jit_model_fused.1} parent=59 // pred_fallthru
        _
      // Predicated region
      $region65: #{jit_model_fused.1} parent=59 // pred_check
        %p1338 = pneg %p206
      $region66: #{jit_model_fused.1} parent=59 // pred_check_branch
        %1340 = sbr.rel (%p1338) target = $region68
      $region67: #{jit_model_fused.1} parent=59 // pred_region
        %s1341 = smul.u32 16, %s21
        %p1342 = scmp.lt.s32.totalorder %s1341, 31
        %s1343 = scalar_select %p1342, %s1341, 31
        %s1344 = smul.addr %s1343, 8
        %s1345 = scalar_lea.vmem %s7, %s1344
      $region68: #{jit_model_fused.1} parent=59 // pred_fallthru
        _
      // Predicated region
      $region69: #{jit_model_fused.1} parent=59 // pred_check
        %p1346 = pneg %p232
      $region70: #{jit_model_fused.1} parent=59 // pred_check_branch
        %1348 = sbr.rel (%p1346) target = $region72
      $region71: #{jit_model_fused.1} parent=59 // pred_region
        %s1349 = smul.u32 16, %s21
        %p1350 = scmp.lt.s32.totalorder %s1349, 31
        %s1351 = scalar_select %p1350, %s1349, 31
        %s1352 = smul.addr %s1351, 8
        %s1353 = scalar_lea.vmem %s8, %s1352
      $region72: #{jit_model_fused.1} parent=59 // pred_fallthru
        _
    $region60: #{jit_model_fused.1} parent=5 // pred_fallthru
      _
  $region6: #{jit_model_fused.1} parent=0 // loop_footer
    %s19 = sadd.s32 1, %s15
  $region7: #{jit_model_fused.1} parent=0 // loop_footer_branch
    %14 = sbr.rel target = $region3
  $region8: #{jit_model_fused.1} parent=0 // loop_exit
    _

</llo_original>
